<compile_context>
chip_gen: v5e
topology: v5e:2x2
jax: 0.10.0
libtpu: 0.0.40
codegen_flags: <defaults>
</compile_context>

<pallas_src>
import functools

import jax
import jax.numpy as jnp
import numpy as np
from jax.experimental import pallas as pl
from jax.experimental.pallas import tpu as pltpu


_MEAN_STD = {
    "google-16": ((0.5, 0.5, 0.5), (0.5, 0.5, 0.5)),
    "google-32": ((0.5, 0.5, 0.5), (0.5, 0.5, 0.5)),
    "dinov2-small": ((0.485, 0.456, 0.406), (0.229, 0.224, 0.225)),
    "dinov2-base": ((0.485, 0.456, 0.406), (0.229, 0.224, 0.225)),
}

_EPS = 1e-6


def _round_up(a, m):
    return -(-a // m) * m


def _vmem_capacity_bytes():
    try:
        cap = int(pltpu.get_tpu_info().vmem_capacity_bytes)
        if cap >= 32 * 1024 * 1024:
            return cap
    except Exception:
        pass
    return 64 * 1024 * 1024  # conservative (v7x per-TC VMEM)


# --------------------------------------------------------------------------
# Kernels
# --------------------------------------------------------------------------
def _fused_kernel(x_ref, o_ref, *, hw, mean, std):
    """One whole volume per grid step: in-kernel min/max + 3 channel stores.

    x_ref : VMEM (1, num_slices, hw)     input volume (any dtype)
    o_ref : VMEM (1, num_slices, 3*hw)   float output, channels along lanes
    """
    v = x_ref[0].astype(jnp.float32)                      # (S, hw)
    vmin = jnp.min(v)
    vmax = jnp.max(v)
    inv = 1.0 / (vmax - vmin + _EPS)
    xn = (v - vmin) * inv                                 # normalized [0,1]
    for c in range(3):                                    # static unroll
        o_ref[0, :, c * hw:(c + 1) * hw] = (
            (xn - mean[c]) * (1.0 / std[c])).astype(o_ref.dtype)


def _affine_kernel(vmin_ref, inv_ref, x_ref, o_ref, *, hw, mean, std):
    """Row-tiled affine pass (tiles may cross volume boundaries).

    vmin_ref, inv_ref : VMEM (ts, 1) f32  per-row volume min / inv-range
    x_ref             : VMEM (ts, hw)     tile of grayscale slices
    o_ref             : VMEM (ts, 3*hw)   float output, channels along lanes
    """
    v = x_ref[...].astype(jnp.float32)                    # (ts, hw)
    xn = (v - vmin_ref[...]) * inv_ref[...]               # sublane broadcast
    for c in range(3):                                    # static unroll
        o_ref[:, c * hw:(c + 1) * hw] = (
            (xn - mean[c]) * (1.0 / std[c])).astype(o_ref.dtype)


# --------------------------------------------------------------------------
# Tiling helpers
# --------------------------------------------------------------------------
def _pick_row_tile(bs, hw_pad, x_item, out_item, vmem_budget):
    """Rows per tile: multiple of 8, sized to VMEM budget & megacore sharding."""
    row_bytes = hw_pad * (x_item + 3 * out_item)          # in + 3ch out per row
    denom = 2 * row_bytes + hw_pad * 4                    # dbl-buffer + f32 temp
    cap_vmem = max(8, (vmem_budget // denom) // 8 * 8)
    cap_rows = _round_up(bs, 8)
    # Keep the input tile >= ~1 MiB (amortize ~0.35us/step overhead) but aim
    # for >= ~8 grid steps on large inputs so dual-TC / megacore shards evenly.
    min_rows = max(8, _round_up(-(-(1 << 20) // (hw_pad * x_item)), 8))
    steps_rows = (bs // 8) // 8 * 8
    ts = min(cap_vmem, cap_rows, max(min_rows, steps_rows))
    return max(8, ts)


# --------------------------------------------------------------------------
# Wrapper
# --------------------------------------------------------------------------
def volume_processor(x, num_slices, feature_extractor="dinov2-small",
                     out_dtype=jnp.float32, _force_two_pass=False):
    """x: [batch*num_slices, 1, H, W] -> [batch*num_slices, 3, H, W] (float)."""
    if feature_extractor not in _MEAN_STD:
        raise ValueError(feature_extractor)
    mean, std = _MEAN_STD[feature_extractor]

    bs, c, h, w = x.shape
    assert c == 1, "expected grayscale input [B*S, 1, H, W]"
    assert bs % num_slices == 0
    b = bs // num_slices
    hw = h * w
    x_item = jnp.dtype(x.dtype).itemsize
    out_item = jnp.dtype(out_dtype).itemsize

    vmem_cap = _vmem_capacity_bytes()
    vmem_budget = min((vmem_cap * 3) // 4, 96 * 1024 * 1024)

    # ---------------- fused path: min/max inside the kernel ----------------
    fused_foot = (2 * num_slices * hw * (x_item + 3 * out_item)
                  + num_slices * hw * 4)                   # dbl-buf + f32 temp
    if (not _force_two_pass) and hw % 128 == 0 and fused_foot <= vmem_budget:
        x3 = x.reshape(b, num_slices, hw)
        kernel = functools.partial(_fused_kernel, hw=hw, mean=mean, std=std)
        out3 = pl.pallas_call(
            kernel,
            out_shape=jax.ShapeDtypeStruct((b, num_slices, 3 * hw), out_dtype),
            grid_spec=pltpu.PrefetchScalarGridSpec(
                num_scalar_prefetch=0,
                grid=(b,),
                in_specs=[pl.BlockSpec((1, num_slices, hw),
                                       lambda i: (i, 0, 0))],
                out_specs=pl.BlockSpec((1, num_slices, 3 * hw),
                                       lambda i: (i, 0, 0)),
            ),
            compiler_params=pltpu.CompilerParams(
                dimension_semantics=("parallel",),
                vmem_limit_bytes=int(vmem_budget),
            ),
            cost_estimate=pl.CostEstimate(
                flops=8 * bs * hw,
                transcendentals=0,
                bytes_accessed=bs * hw * x_item + 3 * bs * hw * out_item,
            ),
        )(x3)
        # (b, S, 3*hw) and (b*S, 3, h, w) share the same row-major flat order.
        return out3.reshape(bs, 3, h, w)

    # ---------------- two-pass path: XLA min/max + row-tiled affine ---------
    # pass 1: per-volume min/max (tiny XLA reduction), expanded to per-row.
    xvol = x.reshape(b, num_slices * hw)
    vmin = jnp.min(xvol, axis=1).astype(jnp.float32)              # (b,)
    vmax = jnp.max(xvol, axis=1).astype(jnp.float32)              # (b,)
    inv = 1.0 / (vmax - vmin + _EPS)                              # (b,)
    vmin_r = jnp.repeat(vmin, num_slices)[:, None]                # (bs, 1)
    inv_r = jnp.repeat(inv, num_slices)[:, None]                  # (bs, 1)

    # pass 2: lane-dense, row-tiled elementwise pass (Pallas).
    hw_pad = _round_up(hw, 128)
    x2 = x.reshape(bs, hw)
    if hw_pad != hw:
        x2 = jnp.pad(x2, ((0, 0), (0, hw_pad - hw)))

    ts = _pick_row_tile(bs, hw_pad, x_item, out_item, vmem_budget)
    bs_pad = _round_up(bs, ts)
    if bs_pad != bs:
        x2 = jnp.pad(x2, ((0, bs_pad - bs), (0, 0)))
        vmin_r = jnp.pad(vmin_r, ((0, bs_pad - bs), (0, 0)))
        inv_r = jnp.pad(inv_r, ((0, bs_pad - bs), (0, 0)))
    n_tiles = bs_pad // ts

    kernel = functools.partial(_affine_kernel, hw=hw_pad, mean=mean, std=std)
    out2 = pl.pallas_call(
        kernel,
        out_shape=jax.ShapeDtypeStruct((bs_pad, 3 * hw_pad), out_dtype),
        grid_spec=pltpu.PrefetchScalarGridSpec(
            num_scalar_prefetch=0,
            grid=(n_tiles,),
            in_specs=[
                pl.BlockSpec((ts, 1), lambda i: (i, 0)),        # per-row vmin
                pl.BlockSpec((ts, 1), lambda i: (i, 0)),        # per-row inv
                pl.BlockSpec((ts, hw_pad), lambda i: (i, 0)),   # slices
            ],
            out_specs=pl.BlockSpec((ts, 3 * hw_pad), lambda i: (i, 0)),
        ),
        compiler_params=pltpu.CompilerParams(
            dimension_semantics=("parallel",),
            vmem_limit_bytes=int(vmem_budget),
        ),
        cost_estimate=pl.CostEstimate(
            flops=8 * bs_pad * hw_pad,
            transcendentals=0,
            bytes_accessed=(bs_pad * hw_pad * x_item
                            + 3 * bs_pad * hw_pad * out_item),
        ),
    )(vmin_r, inv_r, x2)

    out = out2[:bs].reshape(bs, 3, hw_pad)[:, :, :hw]
    return out.reshape(bs, 3, h, w)


# --------------------------------------------------------------------------
# Pure-JAX reference (matches the PyTorch module)
# --------------------------------------------------------------------------
def _reference(x, num_slices, mean, std):
    bs, _, h, w = x.shape
    b = bs // num_slices
    xv = x.astype(jnp.float32).reshape(b, num_slices, h, w)
    x_min = xv.min(axis=(1, 2, 3), keepdims=True)
    x_max = xv.max(axis=(1, 2, 3), keepdims=True)
    xn = (xv - x_min) / (x_max - x_min + _EPS)
    xn = xn.reshape(bs, 1, h, w)
    xn = jnp.repeat(xn, 3, axis=1)
    m = jnp.asarray(mean, jnp.float32).reshape(1, 3, 1, 1)
    s = jnp.asarray(std, jnp.float32).reshape(1, 3, 1, 1)
    return (xn - m) / s


if __name__ == "__main__":
    key = jax.random.PRNGKey(0)
    k1, k2 = jax.random.split(key)

    # Case 1: fused path (hw multiple of 128, volume fits VMEM).
    batch, num_slices, h, w = 2, 8, 16, 16
    x1 = (jax.random.normal(k1, (batch * num_slices, 1, h, w), jnp.float32)
          * 500.0 + 100.0)
    out1 = jax.block_until_ready(
        volume_processor(x1, num_slices, "dinov2-small"))
    ref1 = _reference(x1, num_slices, *_MEAN_STD["dinov2-small"])
    np.testing.assert_allclose(np.asarray(out1), np.asarray(ref1),
                               rtol=1e-5, atol=1e-5)

    # Case 2: two-pass row-tiled path (hw % 128 != 0, awkward num_slices).
    batch2, num_slices2, h2, w2 = 2, 6, 12, 12
    x2 = (jax.random.normal(k2, (batch2 * num_slices2, 1, h2, w2), jnp.float32)
          * 3.0 - 1.0)
    out2 = jax.block_until_ready(
        volume_processor(x2, num_slices2, "google-16"))
    ref2 = _reference(x2, num_slices2, *_MEAN_STD["google-16"])
    np.testing.assert_allclose(np.asarray(out2), np.asarray(ref2),
                               rtol=1e-5, atol=1e-5)

    # Case 3: force the two-pass path at the aligned shape as well.
    out3 = jax.block_until_ready(
        volume_processor(x1, num_slices, "dinov2-small", _force_two_pass=True))
    np.testing.assert_allclose(np.asarray(out3), np.asarray(ref1),
                               rtol=1e-5, atol=1e-5)

    print("KERNEL_OK")
</pallas_src>

<mosaic_0001>
module attributes {stable_mosaic.version = 11 : i64} {
  func.func @_fused_kernel(%arg0: i32, %arg1: memref<1x8x256xf32, #tpu.memory_space<vmem>>, %arg2: memref<1x8x768xf32, #tpu.memory_space<vmem>>) attributes {dimension_semantics = [#tpu.dimension_semantics<parallel>], iteration_bounds = array<i64: 2>, scalar_prefetch = 0 : i64, scratch_operands = 0 : i64, tpu.core_type = #tpu.core_type<tc>, window_params = [{transform_indices = @transform_0, window_bounds = array<i64: 1, 8, 256>}, {transform_indices = @transform_1, window_bounds = array<i64: 1, 8, 768>}]} {
    %c0 = arith.constant 0 : index
    %c0_0 = arith.constant 0 : index
    %c0_1 = arith.constant 0 : index
    %0 = vector.load %arg1[%c0, %c0_0, %c0_1] : memref<1x8x256xf32, #tpu.memory_space<vmem>>, vector<1x8x256xf32>
    %1 = vector.shape_cast %0 : vector<1x8x256xf32> to vector<8x256xf32>
    %2 = vector.shape_cast %1 : vector<8x256xf32> to vector<1x8x256xf32>
    %cst = arith.constant dense<0x7F800000> : vector<1xf32>
    %3 = vector.multi_reduction <minimumf>, %2, %cst [1, 2] : vector<1x8x256xf32> to vector<1xf32>
    %4 = vector.shape_cast %3 : vector<1xf32> to vector<1x1x1xf32>
    %5 = vector.extract %4[0, 0, 0] : f32 from vector<1x1x1xf32>
    %6 = vector.shape_cast %1 : vector<8x256xf32> to vector<1x8x256xf32>
    %cst_2 = arith.constant dense<0xFF800000> : vector<1xf32>
    %7 = vector.multi_reduction <maximumf>, %6, %cst_2 [1, 2] : vector<1x8x256xf32> to vector<1xf32>
    %8 = vector.shape_cast %7 : vector<1xf32> to vector<1x1x1xf32>
    %9 = vector.extract %8[0, 0, 0] : f32 from vector<1x1x1xf32>
    %10 = arith.subf %9, %5 : f32
    %cst_3 = arith.constant 9.99999997E-7 : f32
    %11 = arith.addf %10, %cst_3 : f32
    %cst_4 = arith.constant 1.000000e+00 : f32
    %12 = arith.divf %cst_4, %11 : f32
    %13 = vector.broadcast %5 : f32 to vector<8x256xf32>
    %14 = arith.subf %1, %13 : vector<8x256xf32>
    %15 = vector.broadcast %12 : f32 to vector<8x256xf32>
    %16 = arith.mulf %14, %15 : vector<8x256xf32>
    %cst_5 = arith.constant 4.850000e-01 : f32
    %17 = vector.broadcast %cst_5 : f32 to vector<8x256xf32>
    %18 = arith.subf %16, %17 : vector<8x256xf32>
    %cst_6 = arith.constant 4.36681223 : f32
    %19 = vector.broadcast %cst_6 : f32 to vector<8x256xf32>
    %20 = arith.mulf %18, %19 : vector<8x256xf32>
    %c0_7 = arith.constant 0 : index
    %c0_8 = arith.constant 0 : index
    %c0_9 = arith.constant 0 : index
    %21 = vector.load %arg2[%c0_7, %c0_8, %c0_9] : memref<1x8x768xf32, #tpu.memory_space<vmem>>, vector<1x8x256xf32>
    %22 = vector.shape_cast %21 : vector<1x8x256xf32> to vector<8x256xf32>
    %23 = vector.shape_cast %20 : vector<8x256xf32> to vector<1x8x256xf32>
    tpu.vector_store %arg2[%c0_7, %c0_8, %c0_9], %23 {strides = array<i32>} : memref<1x8x768xf32, #tpu.memory_space<vmem>>, vector<1x8x256xf32>,
    %cst_10 = arith.constant 4.560000e-01 : f32
    %24 = vector.broadcast %cst_10 : f32 to vector<8x256xf32>
    %25 = arith.subf %16, %24 : vector<8x256xf32>
    %cst_11 = arith.constant 4.46428585 : f32
    %26 = vector.broadcast %cst_11 : f32 to vector<8x256xf32>
    %27 = arith.mulf %25, %26 : vector<8x256xf32>
    %c0_12 = arith.constant 0 : index
    %c0_13 = arith.constant 0 : index
    %c256 = arith.constant 256 : index
    %28 = vector.load %arg2[%c0_12, %c0_13, %c256] : memref<1x8x768xf32, #tpu.memory_space<vmem>>, vector<1x8x256xf32>
    %29 = vector.shape_cast %28 : vector<1x8x256xf32> to vector<8x256xf32>
    %30 = vector.shape_cast %27 : vector<8x256xf32> to vector<1x8x256xf32>
    tpu.vector_store %arg2[%c0_12, %c0_13, %c256], %30 {strides = array<i32>} : memref<1x8x768xf32, #tpu.memory_space<vmem>>, vector<1x8x256xf32>,
    %cst_14 = arith.constant 4.060000e-01 : f32
    %31 = vector.broadcast %cst_14 : f32 to vector<8x256xf32>
    %32 = arith.subf %16, %31 : vector<8x256xf32>
    %cst_15 = arith.constant 4.44444466 : f32
    %33 = vector.broadcast %cst_15 : f32 to vector<8x256xf32>
    %34 = arith.mulf %32, %33 : vector<8x256xf32>
    %c0_16 = arith.constant 0 : index
    %c0_17 = arith.constant 0 : index
    %c512 = arith.constant 512 : index
    %35 = vector.load %arg2[%c0_16, %c0_17, %c512] : memref<1x8x768xf32, #tpu.memory_space<vmem>>, vector<1x8x256xf32>
    %36 = vector.shape_cast %35 : vector<1x8x256xf32> to vector<8x256xf32>
    %37 = vector.shape_cast %34 : vector<8x256xf32> to vector<1x8x256xf32>
    tpu.vector_store %arg2[%c0_16, %c0_17, %c512], %37 {strides = array<i32>} : memref<1x8x768xf32, #tpu.memory_space<vmem>>, vector<1x8x256xf32>,
    return
  }
  func.func @transform_0(%arg0: i32) -> (i32, i32, i32) {
    %c0_i32 = arith.constant 0 : i32
    %c0_i32_0 = arith.constant 0 : i32
    %c0_i32_1 = arith.constant 0 : i32
    return %arg0, %c0_i32, %c0_i32_0 : i32, i32, i32
  }
  func.func @transform_1(%arg0: i32) -> (i32, i32, i32) {
    %c0_i32 = arith.constant 0 : i32
    %c0_i32_0 = arith.constant 0 : i32
    %c0_i32_1 = arith.constant 0 : i32
    return %arg0, %c0_i32, %c0_i32_0 : i32, i32, i32
  }
}

</mosaic_0001>

<llo_original>
// kernel: tpu_custom_call.1
$region0: #{tpu_custom_call.1}
  #allocation0 [shape = 'u32[]', space=smem, size = 0x4, offset = 0x4, fixed_abs, tag = 'smem constant byte address 0x4 - core index']
  #allocation1 [shape = 'u32[72,128]{1,0:T(1,128)}', space=vmem, size = 0x9000, scoped, tag = 'internal scratch']
  %s0 = inlined_call_operand.hbm [shape: f32[2,8,256], index: 0, kind: input, shape index: {}]
  %s1 = inlined_call_operand.hbm [shape: f32[2,8,768], index: 1, kind: output, shape index: {}]
  %s2 = sld [smem:[#allocation0]]
  $region41: #{tpu_custom_call.1} parent=0
    _
  %s4 = ssub.s32 1, %s2
  %s5 = scalar_select 0, %s4, %s2
  $region1: #{tpu_custom_call.1} parent=0
    #allocation2 [shape = 'u8[16384]{0}', space=vmem, size = 0x4000, scoped, tag = 'input window, operand 0']
    #allocation3 [shape = 's32[2]{0}', space=sflag, size = 0x8, scoped, tag = 'scoped memory for tpu_custom_call.1']
    #allocation4 [shape = 's32[2]{0}', space=sflag, size = 0x8, scoped, tag = 'scoped memory for tpu_custom_call.1']
    #allocation5 [shape = 'u8[49152]{0}', space=vmem, size = 0xc000, scoped, tag = 'output window, operand 0']
    %6 = vsyncpa [#allocation3], 0
    %s7 = scalar_lea.sflag [#allocation3], 1
    %8 = vsyncpa %s7, 0
    %9 = vsyncpa [#allocation4], 0
    %s10 = scalar_lea.sflag [#allocation4], 1
    %11 = vsyncpa %s10, 0
    loop: start=0, step=1, limit=4
    $region2: #{tpu_custom_call.1} parent=1 // loop_pre_header
      _
    $region3: #{tpu_custom_call.1} parent=1 // loop_header
      %s13 = sphi 0, %s17
      %p14 = scmp.ge.s32.totalorder %s13, 4
      %s23 = sphi 0, %s25
      %s26 = sphi 0, %s23
      %s27 = sphi 0, %s26
      %s43 = sphi 0, %s27
      %s49 = sphi 0, %s51
      %s52 = sphi 0, %s49
      %s53 = sphi 0, %s52
      %s69 = sphi 0, %s53
    $region4: #{tpu_custom_call.1} parent=1 // loop_header_branch
      %16 = sbr.rel (%p14) target = $region8
    $region5: #{tpu_custom_call.1} parent=1 // loop_body
      %s18 = ssub.s32 %s13, 1
      %s19 = ssub.s32 %s13, 2
      %s20 = sadd.s32 %s13, 1
      %s21 = ssub.s32 %s13, %s20
      %p22 = scmp.eq.s32.totalorder %s21, 0
      %s24 = sadd.s32 %s23, 1
      %s25 = scalar_select %p22, %s23, %s24
      %p28 = pneg %p22
      %p29 = scmp.eq.s32.totalorder %s13, 1
      %p30 = por %p28, %p29
      %p31 = scmp.ne.s32.totalorder %s23, %s26
      %p32 = scmp.eq.s32.totalorder %s13, 0
      %p33 = por %p31, %p32
      %p34 = scmp.ne.s32.totalorder %s23, %s26
      %p35 = scmp.eq.s32.totalorder %s18, 1
      %p36 = por %p34, %p35
      %p37 = scmp.ne.s32.totalorder %s26, %s27
      %p38 = scmp.eq.s32.totalorder %s18, 0
      %p39 = por %p37, %p38
      %p40 = scmp.ne.s32.totalorder %s26, %s27
      %p41 = scmp.eq.s32.totalorder %s19, 1
      %p42 = por %p40, %p41
      %p44 = scmp.ne.s32.totalorder %s27, %s43
      %p45 = scmp.eq.s32.totalorder %s19, 0
      %p46 = por %p44, %p45
      %s47 = ssub.s32 %s13, %s20
      %p48 = scmp.eq.s32.totalorder %s47, 0
      %s50 = sadd.s32 %s49, 1
      %s51 = scalar_select %p48, %s49, %s50
      %p54 = pneg %p48
      %p55 = scmp.eq.s32.totalorder %s13, 1
      %p56 = por %p54, %p55
      %p57 = scmp.ne.s32.totalorder %s49, %s52
      %p58 = scmp.eq.s32.totalorder %s13, 0
      %p59 = por %p57, %p58
      %p60 = scmp.ne.s32.totalorder %s49, %s52
      %p61 = scmp.eq.s32.totalorder %s18, 1
      %p62 = por %p60, %p61
      %p63 = scmp.ne.s32.totalorder %s52, %s53
      %p64 = scmp.eq.s32.totalorder %s18, 0
      %p65 = por %p63, %p64
      %p66 = scmp.ne.s32.totalorder %s52, %s53
      %p67 = scmp.eq.s32.totalorder %s19, 1
      %p68 = por %p66, %p67
      %p70 = scmp.ne.s32.totalorder %s53, %s69
      %p71 = scmp.eq.s32.totalorder %s19, 0
      %p72 = por %p70, %p71
      %p73 = scmp.le.s32.totalorder 1, %s13
      %p74 = scmp.lt.s32.totalorder %s13, 3
      %p75 = pnand %p73, %p74
      %p76 = pneg %p75
      // Predicated region
      $region9: #{tpu_custom_call.1} parent=5 // pred_check
        _
      $region10: #{tpu_custom_call.1} parent=5 // pred_check_branch
        %78 = sbr.rel (%p75) target = $region12
      $region11: #{tpu_custom_call.1} parent=5 // pred_region
        %s79 = ssub.s32 %s13, 1
      $region12: #{tpu_custom_call.1} parent=5 // pred_fallthru
        _
      %p80 = scmp.lt.s32.totalorder %s13, 2
      // Predicated region
      $region13: #{tpu_custom_call.1} parent=5 // pred_check
        %p81 = pneg %p80
      $region14: #{tpu_custom_call.1} parent=5 // pred_check_branch
        %83 = sbr.rel (%p81) target = $region16
      $region15: #{tpu_custom_call.1} parent=5 // pred_region
        // Predicated region
        $region17: #{tpu_custom_call.1} parent=15 // pred_check
          %p84 = pneg %p33
        $region18: #{tpu_custom_call.1} parent=15 // pred_check_branch
          %86 = sbr.rel (%p84) target = $region20
        $region19: #{tpu_custom_call.1} parent=15 // pred_region
          %s87 = sand.u32 %s23, 1
          %s88 = scalar_lea.sflag [#allocation3], %s87
          %s89 = sand.u32 %s23, 1
          %s90 = smul.addr %s89, 16
          %s91 = scalar_lea.vmem [#allocation2], %s90
          %93 = vsyncadd %s88, 0
          %s94 = smul.addr %s13, 2
          %s95 = smul.addr %s94, 8
          %s96 = scalar_lea.hbm %s0, %s95
          %s98 = sshll.u32 %s96, 4
          %s99 = int_to_ptr.hbm [resolvable:$true] %s98
          %s100 = sshll.u32 %s91, 4
          %s101 = int_to_ptr.vmem [resolvable:$true] %s100
          %103 = dma.hbm_to_vmem [thread:$0]  %s99, 256, %s101, %s88
        $region20: #{tpu_custom_call.1} parent=15 // pred_fallthru
          _
      $region16: #{tpu_custom_call.1} parent=5 // pred_fallthru
        _
      %p104 = scmp.le.s32.totalorder 1, %s13
      %p105 = scmp.lt.s32.totalorder %s13, 3
      %p106 = pnand %p104, %p105
      %p107 = pneg %p106
      // Predicated region
      $region21: #{tpu_custom_call.1} parent=5 // pred_check
        _
      $region22: #{tpu_custom_call.1} parent=5 // pred_check_branch
        %109 = sbr.rel (%p106) target = $region24
      $region23: #{tpu_custom_call.1} parent=5 // pred_region
        %s110 = ssub.s32 %s13, 1
        %s111 = sand.u32 %s26, 1
        %s112 = scalar_lea.sflag [#allocation3], %s111
        %s113 = sand.u32 %s26, 1
        %s114 = smul.addr %s113, 16
        %s115 = scalar_lea.vmem [#allocation2], %s114
        // Predicated region
        $region25: #{tpu_custom_call.1} parent=23 // pred_check
          %p116 = pneg %p39
        $region26: #{tpu_custom_call.1} parent=23 // pred_check_branch
          %118 = sbr.rel (%p116) target = $region28
        $region27: #{tpu_custom_call.1} parent=23 // pred_region
          %120 = dma.done %s112, 256
        $region28: #{tpu_custom_call.1} parent=23 // pred_fallthru
          _
        %s121 = sand.u32 %s26, 1
        %s122 = scalar_lea.sflag [#allocation3], %s121
        %s123 = sand.u32 %s26, 1
        %s124 = smul.addr %s123, 16
        %s125 = scalar_lea.vmem [#allocation2], %s124
        %p126 = pneg %p39
        %p127 = pneg %p36
        %p128 = pneg %p65
        %p129 = pneg %p62
        %s130 = sand.u32 %s52, 1
        %s131 = scalar_lea.sflag [#allocation4], %s130
        %s132 = sand.u32 %s52, 1
        %s133 = smul.addr %s132, 48
        %s134 = scalar_lea.vmem [#allocation5], %s133
        %v135 = vld [vmem:[%s115] sm:$0xff]
        %v136 = vld [vmem:[%s115 + $0x8] sm:$0xff]
        %v137 = vmin.f32 %v135, %v136
        %138 = vmin.xlane.f32.xlu0 %v137
        %v139 = vpop.xlane.xlu0 %138
        %v140 = vrot.slane %v139, 4
        %v141 = vmin.f32 %v139, %v140
        %v142 = vrot.slane %v141, 2
        %v143 = vmin.f32 %v141, %v142
        %v144 = vrot.slane %v143, 1
        %v145 = vmin.f32 %v143, %v144
        %s146 = vtos %v145
        %v147 = vmax.f32 %v135, %v136
        %148 = vmax.xlane.f32.xlu0 %v147
        %v149 = vpop.xlane.xlu0 %148
        %v150 = vrot.slane %v149, 4
        %v151 = vmax.f32 %v149, %v150
        %v152 = vrot.slane %v151, 2
        %v153 = vmax.f32 %v151, %v152
        %v154 = vrot.slane %v153, 1
        %v155 = vmax.f32 %v153, %v154
        %s156 = vtos %v155
        %s157 = ssub.f32 %s156, %s146
        %s158 = sadd.f32 %s157, 1e-06
        %v159 = vstv %s158
        %v160 = vrcp.pop %v159
        %v161 = vmul.f32 %v159, %v160
        %v162 = vsub.f32 1.0, %v161
        %v163 = vmul.f32 %v160, %v162
        %v164 = vadd.f32 %v160, %v163
        %vm165 = vweird.f32 %v159
        %vm166 = vweird.f32 %v160
        %vm167 = vmor %vm165, %vm166
        %v168 = vsel %vm167, %v160, %v164
        %v169 = vand.u32 2147483647, %v159
        %vm170 = vcmp.eq.f32.partialorder %v169, 8.507059e+37
        %v171 = vand.u32 %v159, 2147483648
        %v172 = vor.u32 1.1754944e-38, %v171
        %v173 = vsel %vm170, %v172, %v168
        %s174 = vtos %v173
        %v175 = vstv %s146
        %v176 = vsub.f32 %v135, %v175
        %v177 = vsub.f32 %v136, %v175
        %v178 = vstv %s174
        %v179 = vmul.f32 %v176, %v178
        %v180 = vmul.f32 %v177, %v178
        %v181 = vsub.f32 %v179, 0.485
        %v182 = vsub.f32 %v180, 0.485
        %v183 = vmul.f32 %v181, 4.366812
        %v184 = vmul.f32 %v182, 4.366812
        %185 = vst [vmem:[%s134] sm:$0xff] %v183
        %186 = vst [vmem:[%s134 + $0x8] sm:$0xff] %v184
        %v187 = vsub.f32 %v179, 0.456
        %v188 = vsub.f32 %v180, 0.456
        %v189 = vmul.f32 %v187, 4.464286
        %v190 = vmul.f32 %v188, 4.464286
        %191 = vst [vmem:[%s134 + $0x10] sm:$0xff] %v189
        %192 = vst [vmem:[%s134 + $0x18] sm:$0xff] %v190
        %v193 = vsub.f32 %v179, 0.406
        %v194 = vsub.f32 %v180, 0.406
        %v195 = vmul.f32 %v193, 4.4444447
        %v196 = vmul.f32 %v194, 4.4444447
        %197 = vst [vmem:[%s134 + $0x20] sm:$0xff] %v195
        %198 = vst [vmem:[%s134 + $0x28] sm:$0xff] %v196
        %s199 = sand.u32 %s52, 1
        %s200 = scalar_lea.sflag [#allocation4], %s199
        %s201 = sand.u32 %s52, 1
        %s202 = smul.addr %s201, 48
        %s203 = scalar_lea.vmem [#allocation5], %s202
        // Predicated region
        $region29: #{tpu_custom_call.1} parent=23 // pred_check
          %p204 = pneg %p62
        $region30: #{tpu_custom_call.1} parent=23 // pred_check_branch
          %206 = sbr.rel (%p204) target = $region32
        $region31: #{tpu_custom_call.1} parent=23 // pred_region
          %208 = vsyncadd %s200, 0
          %s209 = smul.addr %s18, 6
          %s210 = smul.addr %s209, 8
          %s211 = scalar_lea.hbm %s1, %s210
          %s213 = sshll.u32 %s203, 4
          %s214 = int_to_ptr.vmem [resolvable:$true] %s213
          %s215 = sshll.u32 %s211, 4
          %s216 = int_to_ptr.hbm [resolvable:$true] %s215
          %218 = dma.vmem_to_hbm [thread:$0]  %s214, 768, %s216, %s200
        $region32: #{tpu_custom_call.1} parent=23 // pred_fallthru
          _
      $region24: #{tpu_custom_call.1} parent=5 // pred_fallthru
        _
      %p219 = scmp.le.s32.totalorder 2, %s13
      // Predicated region
      $region33: #{tpu_custom_call.1} parent=5 // pred_check
        %p220 = pneg %p219
      $region34: #{tpu_custom_call.1} parent=5 // pred_check_branch
        %222 = sbr.rel (%p220) target = $region36
      $region35: #{tpu_custom_call.1} parent=5 // pred_region
        %s223 = ssub.s32 %s13, 2
        // Predicated region
        $region37: #{tpu_custom_call.1} parent=35 // pred_check
          %p224 = pneg %p68
        $region38: #{tpu_custom_call.1} parent=35 // pred_check_branch
          %226 = sbr.rel (%p224) target = $region40
        $region39: #{tpu_custom_call.1} parent=35 // pred_region
          %s227 = sand.u32 %s53, 1
          %s228 = scalar_lea.sflag [#allocation4], %s227
          %s229 = sand.u32 %s53, 1
          %s230 = smul.addr %s229, 48
          %s231 = scalar_lea.vmem [#allocation5], %s230
          %233 = dma.done %s228, 768
        $region40: #{tpu_custom_call.1} parent=35 // pred_fallthru
          _
      $region36: #{tpu_custom_call.1} parent=5 // pred_fallthru
        _
    $region6: #{tpu_custom_call.1} parent=1 // loop_footer
      %s17 = sadd.s32 1, %s13
    $region7: #{tpu_custom_call.1} parent=1 // loop_footer_branch
      %12 = sbr.rel target = $region3
    $region8: #{tpu_custom_call.1} parent=1 // loop_exit
      _
    %234 = vsyncpa [#allocation3], 1
    %s235 = scalar_lea.sflag [#allocation3], 1
    %236 = vsyncpa %s235, 1
    %237 = vsyncpa [#allocation4], 1
    %s238 = scalar_lea.sflag [#allocation4], 1
    %239 = vsyncpa %s238, 1

</llo_original>
